<compile_context>
chip_gen: v5e
topology: v5e:2x2
jax: 0.10.0
libtpu: 0.0.40
codegen_flags: <defaults>
</compile_context>

<pallas_src>
import functools

import jax
import jax.numpy as jnp
from jax import lax
from jax.experimental import pallas as pl
from jax.experimental.pallas import tpu as pltpu

_MIB = 1024 * 1024


def _partial_grad_kernel(logits_ref, targets_ref, in_len_ref, tgt_len_ref,
                         loss_ref, mask_ref, grad_ref, acc_ref):
    s_idx = pl.program_id(1)          # time-split half (v7x both-core path)
    t_idx = pl.program_id(2)          # inner time tile (reduction axis)
    n_t = pl.num_programs(2)

    @pl.when(t_idx == 0)
    def _():
        acc_ref[...] = jnp.zeros_like(acc_ref)

    logits = logits_ref[...].astype(jnp.float32)          # (bB, bT, V) f32 math
    targets = targets_ref[...]                            # (bB, bT, 1) int32
    in_len = in_len_ref[...]                              # (bB, 1) int32
    tgt_len = tgt_len_ref[...]                            # (bB, 1) int32
    bB, bT, V = logits.shape

    # Global frame index of every row in this tile.  All per-(b,t) quantities
    # are kept in (bB, bT, 1) layout (matching the V-reduction keepdims) so no
    # lane<->sublane relayout is needed.
    t0 = (s_idx * n_t + t_idx) * bT
    t_iota = t0 + lax.broadcasted_iota(jnp.int32, (bB, bT, 1), 1)
    time_mask = t_iota < in_len[:, None, :]                # (bB, bT, 1)
    batch_mask = tgt_len > 0                               # (bB, 1)
    valid = jnp.logical_and(time_mask, batch_mask[:, None, :])

    # Stable softmax statistics.
    m = jnp.max(logits, axis=-1, keepdims=True)            # (bB, bT, 1)
    z = jnp.exp(logits - m)
    denom = jnp.sum(z, axis=-1, keepdims=True)

    # Fused one-hot: bool match mask instead of a materialized f32 one-hot.
    v_iota = lax.broadcasted_iota(jnp.int32, (bB, bT, V), 2)
    match = v_iota == targets                               # (bB, bT, V) bool
    logit_tgt = jnp.sum(jnp.where(match, logits, 0.0), axis=-1, keepdims=True)
    # (f32 logits are dead past this point; only z / match stay live V-wide.)

    lse = m + jnp.log(denom)                                # (bB, bT, 1)
    logp_target = logit_tgt - lse
    # where() (not multiply) keeps NaN/inf from padded frames out of the sum.
    contrib = jnp.where(valid, -logp_target, 0.0)           # (bB, bT, 1)
    acc_ref[...] += jnp.sum(contrib, axis=1)                # (bB, 1)

    # "Backward inside forward": grad of sum(loss) w.r.t. logits, fully fused
    # (softmax = z * 1/denom, one-hot subtraction via the bool match mask).
    inv = pl.reciprocal(denom, approx=False)    # V-independent -> exact is free
    p = z * inv
    grad = jnp.where(valid, jnp.where(match, p - 1.0, p), 0.0)
    grad_ref[...] = grad.astype(grad_ref.dtype)

    @pl.when(t_idx == n_t - 1)
    def _():
        loss_ref[0] = acc_ref[...]
        mask_ref[0] = batch_mask.astype(jnp.int32)


def _vmem_capacity_bytes():
    try:
        info = pltpu.get_tpu_info()
        cap = getattr(info, "vmem_capacity_bytes", None)
        if cap:
            return int(cap)
    except Exception:
        pass
    return 128 * _MIB


def _budgets():
    """(data-tile budget, vmem_limit) in bytes, per TPU generation."""
    cap = _vmem_capacity_bytes()
    if cap <= 80 * _MIB:                 # v7x-class: 64 MiB VMEM / TensorCore
        return 36 * _MIB, 56 * _MIB
    return 44 * _MIB, 100 * _MIB         # v5e / v6e: 128 MiB VMEM


def _pick_tile_t(T, V, tile_b, in_itemsize, grad_itemsize, data_budget):
    """Frames per time tile, sized against the per-generation VMEM budget."""
    # Bytes per (frame, batch-row):
    #   double-buffered logits block + double-buffered grad block
    #   + ~4 V-wide f32 compute temporaries (f32 cast / z / match / grad)
    #   + the lane-padded (->128) int32 targets block, double-buffered.
    per_frame_row = V * (2 * in_itemsize + 2 * grad_itemsize + 4 * 4) + 2 * 128 * 4
    rows = int(data_budget) // (tile_b * per_frame_row)
    if rows >= T:
        return T
    return max(8, (rows // 8) * 8)       # multiple of 8 keeps blocks sublane-legal


@functools.partial(jax.jit, static_argnames=("grad_dtype", "tile_b", "tile_t"))
def partial_grad_forward(input_tensor, targets, input_lengths, target_lengths,
                         grad_dtype=jnp.bfloat16, tile_b=None, tile_t=None):
    """JAX/Pallas equivalent of PartialGrad.forward.

    PyTorch returns (new_tensor, mask) and stashes `grad` in the autograd ctx
    for GradInsert; JAX is functional so the pre-computed grad is returned
    explicitly.  grad_dtype defaults to bfloat16 (halves the HBM write traffic
    of this bandwidth-bound kernel; softmax math stays f32); pass jnp.float32
    for bit-parity with the PyTorch reference.
    """
    B, T, V = input_tensor.shape
    grad_dtype = jnp.dtype(grad_dtype)
    in_itemsize = jnp.dtype(input_tensor.dtype).itemsize

    data_budget, vmem_limit = _budgets()
    if tile_b is None:
        tile_b = min(B, 8)               # 8 (sublane) or full B -> blocks legal
    if tile_t is None:
        tile_t = _pick_tile_t(T, V, tile_b, in_itemsize, grad_dtype.itemsize,
                              data_budget)

    b_tiles = pl.cdiv(B, tile_b)
    t_tiles = pl.cdiv(T, tile_t)
    # On v7x the "parallel" grid axes shard across the 2 TensorCores; when the
    # batch axis has a single tile, split the time range in two so neither core
    # idles (each half keeps its own partial loss, summed in the wrapper).
    # No-op on single-TC v5e/v6e.
    t_split = 2 if (b_tiles == 1 and t_tiles >= 2 and t_tiles % 2 == 0) else 1
    t_inner = t_tiles // t_split

    def data_map(b, s, t):
        return (b, s * t_inner + t, 0)

    cost = pl.CostEstimate(
        flops=8 * B * T * V,
        transcendentals=B * T * V,
        bytes_accessed=B * T * V * (in_itemsize + grad_dtype.itemsize) + B * T * 4,
    )

    out_shape = (
        jax.ShapeDtypeStruct((t_split, B, 1), jnp.float32),   # partial per-item loss
        jax.ShapeDtypeStruct((t_split, B, 1), jnp.int32),     # batch mask
        jax.ShapeDtypeStruct((B, T, V), grad_dtype),          # grad w.r.t. input
    )
    loss_p, mask_p, grad = pl.pallas_call(
        _partial_grad_kernel,
        out_shape=out_shape,
        grid_spec=pltpu.PrefetchScalarGridSpec(
            num_scalar_prefetch=0,
            grid=(b_tiles, t_split, t_inner),
            in_specs=[
                pl.BlockSpec((tile_b, tile_t, V), data_map),          # logits
                pl.BlockSpec((tile_b, tile_t, 1), data_map),          # targets
                pl.BlockSpec((tile_b, 1), lambda b, s, t: (b, 0)),    # input_lengths
                pl.BlockSpec((tile_b, 1), lambda b, s, t: (b, 0)),    # target_lengths
            ],
            out_specs=(
                pl.BlockSpec((1, tile_b, 1), lambda b, s, t: (s, b, 0)),  # loss
                pl.BlockSpec((1, tile_b, 1), lambda b, s, t: (s, b, 0)),  # mask
                pl.BlockSpec((tile_b, tile_t, V), data_map),              # grad
            ),
            scratch_shapes=[pltpu.VMEM((tile_b, 1), jnp.float32)],
        ),
        compiler_params=pltpu.CompilerParams(
            dimension_semantics=("parallel", "parallel", "arbitrary"),
            vmem_limit_bytes=vmem_limit,
        ),
        cost_estimate=cost,
    )(
        input_tensor,
        targets.astype(jnp.int32)[:, :, None],
        input_lengths.reshape(B, 1).astype(jnp.int32),
        target_lengths.reshape(B, 1).astype(jnp.int32),
    )

    loss = jnp.sum(loss_p, axis=0)[:, 0]          # combine time-split partials
    mask = mask_p[0, :, 0].astype(jnp.bool_)
    # TODO(synk): PyTorch's func returns loss only for mask-valid items via
    # boolean indexing (dynamic shape); with static shapes we return the full
    # (B,) loss plus the mask, which carries the same information.
    return loss, mask, grad


if __name__ == "__main__":
    def ref_outputs(logits, targets, input_lengths, target_lengths):
        T = logits.shape[1]

        def loss_fn(x):
            logp = jax.nn.log_softmax(x.astype(jnp.float32), axis=-1)
            tgt_lp = jnp.take_along_axis(logp, targets[..., None], axis=-1)[..., 0]
            tmask = jnp.arange(T)[None, :] < input_lengths[:, None]
            bmask = (target_lengths > 0)[:, None]
            v = (tmask & bmask).astype(jnp.float32)
            return jnp.sum(-tgt_lp * v, axis=1)

        loss = loss_fn(logits)
        grad = jax.grad(lambda x: loss_fn(x).sum())(logits.astype(jnp.float32))
        return loss, target_lengths > 0, grad

    key = jax.random.PRNGKey(0)

    # Case 1: single-tile path, f32 grad (exact-recip parity with reference).
    B, T, V = 4, 16, 128
    k1, k2 = jax.random.split(key)
    logits = jax.random.normal(k1, (B, T, V), dtype=jnp.float32)
    targets = jax.random.randint(k2, (B, T), 0, V, dtype=jnp.int32)
    in_len = jnp.array([16, 10, 7, 16], dtype=jnp.int32)
    tgt_len = jnp.array([5, 3, 0, 8], dtype=jnp.int32)      # item 2 masked out
    loss, mask, grad = partial_grad_forward(logits, targets, in_len, tgt_len,
                                            grad_dtype=jnp.float32)
    jax.block_until_ready((loss, mask, grad))
    r_loss, r_mask, r_grad = ref_outputs(logits, targets, in_len, tgt_len)
    assert jnp.allclose(loss, r_loss, atol=1e-4, rtol=1e-4), "case1 loss mismatch"
    assert jnp.array_equal(mask, r_mask), "case1 mask mismatch"
    assert jnp.allclose(grad, r_grad, atol=1e-4, rtol=1e-4), "case1 grad mismatch"

    # Case 2: multi-tile time axis + 2-way time split (v7x both-core path),
    # default bf16 grad output.
    B, T, V = 4, 64, 128
    k1, k2 = jax.random.split(jax.random.fold_in(key, 1))
    logits = jax.random.normal(k1, (B, T, V), dtype=jnp.float32)
    targets = jax.random.randint(k2, (B, T), 0, V, dtype=jnp.int32)
    in_len = jnp.array([64, 37, 1, 50], dtype=jnp.int32)
    tgt_len = jnp.array([9, 0, 2, 6], dtype=jnp.int32)
    loss, mask, grad = partial_grad_forward(logits, targets, in_len, tgt_len,
                                            tile_t=8)
    jax.block_until_ready((loss, mask, grad))
    r_loss, r_mask, r_grad = ref_outputs(logits, targets, in_len, tgt_len)
    assert jnp.allclose(loss, r_loss, atol=1e-3, rtol=1e-4), "case2 loss mismatch"
    assert jnp.array_equal(mask, r_mask), "case2 mask mismatch"
    assert jnp.allclose(grad.astype(jnp.float32), r_grad,
                        atol=1e-2, rtol=2e-2), "case2 grad mismatch"

    # Case 3: partial batch and partial time tiles (padding must not leak NaN).
    B, T, V = 10, 20, 128
    k1, k2 = jax.random.split(jax.random.fold_in(key, 2))
    logits = jax.random.normal(k1, (B, T, V), dtype=jnp.float32)
    targets = jax.random.randint(k2, (B, T), 0, V, dtype=jnp.int32)
    in_len = jnp.array([20, 3, 17, 20, 8, 1, 20, 11, 5, 20], dtype=jnp.int32)
    tgt_len = jnp.array([4, 0, 2, 7, 0, 1, 3, 2, 5, 6], dtype=jnp.int32)
    loss, mask, grad = partial_grad_forward(logits, targets, in_len, tgt_len,
                                            grad_dtype=jnp.float32, tile_t=8)
    jax.block_until_ready((loss, mask, grad))
    r_loss, r_mask, r_grad = ref_outputs(logits, targets, in_len, tgt_len)
    assert jnp.allclose(loss, r_loss, atol=1e-4, rtol=1e-4), "case3 loss mismatch"
    assert jnp.array_equal(mask, r_mask), "case3 mask mismatch"
    assert jnp.allclose(grad, r_grad, atol=1e-4, rtol=1e-4), "case3 grad mismatch"

    print("KERNEL_OK")
</pallas_src>

<mosaic_0001>
module attributes {stable_mosaic.version = 11 : i64} {
  func.func @_partial_grad_kernel(%arg0: i32, %arg1: i32, %arg2: i32, %arg3: memref<4x16x128xf32, #tpu.memory_space<vmem>>, %arg4: memref<4x16x1xi32, #tpu.memory_space<vmem>>, %arg5: memref<4x1xi32, #tpu.memory_space<vmem>>, %arg6: memref<4x1xi32, #tpu.memory_space<vmem>>, %arg7: memref<1x4x1xf32, #tpu.memory_space<vmem>>, %arg8: memref<1x4x1xi32, #tpu.memory_space<vmem>>, %arg9: memref<4x16x128xf32, #tpu.memory_space<vmem>>, %arg10: memref<4x1xf32, #tpu.memory_space<vmem>>) attributes {dimension_semantics = [#tpu.dimension_semantics<parallel>, #tpu.dimension_semantics<parallel>, #tpu.dimension_semantics<arbitrary>], iteration_bounds = array<i64: 1, 1, 1>, scalar_prefetch = 0 : i64, scratch_operands = 1 : i64, tpu.core_type = #tpu.core_type<tc>, window_params = [{transform_indices = @transform_0, window_bounds = array<i64: 4, 16, 128>}, {transform_indices = @transform_1, window_bounds = array<i64: 4, 16, 1>}, {transform_indices = @transform_2, window_bounds = array<i64: 4, 1>}, {transform_indices = @transform_3, window_bounds = array<i64: 4, 1>}, {transform_indices = @transform_4, window_bounds = array<i64: 1, 4, 1>}, {transform_indices = @transform_5, window_bounds = array<i64: 1, 4, 1>}, {transform_indices = @transform_6, window_bounds = array<i64: 4, 16, 128>}]} {
    %c0_i32 = arith.constant 0 : i32
    %0 = arith.cmpi eq, %arg2, %c0_i32 : i32
    %1 = arith.extui %0 : i1 to i32
    %c0_i32_0 = arith.constant 0 : i32
    %2 = arith.cmpi ne, %1, %c0_i32_0 : i32
    scf.if %2 {
      %cst_28 = arith.constant 0.000000e+00 : f32
      %60 = vector.broadcast %cst_28 : f32 to vector<4x1xf32>
      %c0_29 = arith.constant 0 : index
      %c0_30 = arith.constant 0 : index
      %61 = vector.load %arg10[%c0_29, %c0_30] : memref<4x1xf32, #tpu.memory_space<vmem>>, vector<4x1xf32>
      tpu.vector_store %arg10[%c0_29, %c0_30], %60 {strides = array<i32>} : memref<4x1xf32, #tpu.memory_space<vmem>>, vector<4x1xf32>,
    } else {
    }
    %c0 = arith.constant 0 : index
    %c0_1 = arith.constant 0 : index
    %c0_2 = arith.constant 0 : index
    %3 = vector.load %arg3[%c0, %c0_1, %c0_2] : memref<4x16x128xf32, #tpu.memory_space<vmem>>, vector<4x16x128xf32>
    %c0_3 = arith.constant 0 : index
    %c0_4 = arith.constant 0 : index
    %c0_5 = arith.constant 0 : index
    %4 = vector.load %arg4[%c0_3, %c0_4, %c0_5] : memref<4x16x1xi32, #tpu.memory_space<vmem>>, vector<4x16x1xi32>
    %c0_6 = arith.constant 0 : index
    %c0_7 = arith.constant 0 : index
    %5 = vector.load %arg5[%c0_6, %c0_7] : memref<4x1xi32, #tpu.memory_space<vmem>>, vector<4x1xi32>
    %c0_8 = arith.constant 0 : index
    %c0_9 = arith.constant 0 : index
    %6 = vector.load %arg6[%c0_8, %c0_9] : memref<4x1xi32, #tpu.memory_space<vmem>>, vector<4x1xi32>
    %c1_i32 = arith.constant 1 : i32
    %7 = arith.muli %arg1, %c1_i32 : i32
    %8 = arith.addi %7, %arg2 : i32
    %c16_i32 = arith.constant 16 : i32
    %9 = arith.muli %8, %c16_i32 : i32
    %10 = tpu.iota {dimensions = array<i32: 1>} : vector<4x16x1xi32>
    %11 = vector.broadcast %9 : i32 to vector<4x16x1xi32>
    %12 = arith.addi %11, %10 : vector<4x16x1xi32>
    %13 = vector.shape_cast %5 : vector<4x1xi32> to vector<4x1x1xi32>
    %14 = vector.broadcast %13 : vector<4x1x1xi32> to vector<4x16x1xi32>
    %15 = arith.cmpi slt, %12, %14 : vector<4x16x1xi32>
    %c0_i32_10 = arith.constant 0 : i32
    %16 = vector.broadcast %c0_i32_10 : i32 to vector<4x1xi32>
    %17 = arith.cmpi sgt, %6, %16 : vector<4x1xi32>
    %18 = vector.shape_cast %17 : vector<4x1xi1> to vector<4x1x1xi1>
    %19 = vector.broadcast %18 : vector<4x1x1xi1> to vector<4x16x1xi1>
    %20 = arith.andi %15, %19 : vector<4x16x1xi1>
    %cst = arith.constant dense<0xFF800000> : vector<4x16xf32>
    %21 = vector.multi_reduction <maximumf>, %3, %cst [2] : vector<4x16x128xf32> to vector<4x16xf32>
    %22 = vector.shape_cast %21 : vector<4x16xf32> to vector<4x16x1xf32>
    %23 = vector.broadcast %22 : vector<4x16x1xf32> to vector<4x16x128xf32>
    %24 = arith.subf %3, %23 : vector<4x16x128xf32>
    %25 = math.exp %24 : vector<4x16x128xf32>
    %cst_11 = arith.constant dense<0.000000e+00> : vector<4x16xf32>
    %26 = vector.multi_reduction <add>, %25, %cst_11 [2] : vector<4x16x128xf32> to vector<4x16xf32>
    %27 = vector.shape_cast %26 : vector<4x16xf32> to vector<4x16x1xf32>
    %28 = tpu.iota {dimensions = array<i32: 2>} : vector<4x16x128xi32>
    %29 = vector.broadcast %4 : vector<4x16x1xi32> to vector<4x16x128xi32>
    %30 = arith.cmpi eq, %28, %29 : vector<4x16x128xi32>
    %cst_12 = arith.constant 0.000000e+00 : f32
    %31 = vector.broadcast %cst_12 : f32 to vector<4x16x128xf32>
    %32 = arith.select %30, %3, %31 : vector<4x16x128xi1>, vector<4x16x128xf32>
    %cst_13 = arith.constant dense<0.000000e+00> : vector<4x16xf32>
    %33 = vector.multi_reduction <add>, %32, %cst_13 [2] : vector<4x16x128xf32> to vector<4x16xf32>
    %34 = vector.shape_cast %33 : vector<4x16xf32> to vector<4x16x1xf32>
    %35 = math.log %27 : vector<4x16x1xf32>
    %36 = arith.addf %22, %35 : vector<4x16x1xf32>
    %37 = arith.subf %34, %36 : vector<4x16x1xf32>
    %cst_14 = arith.constant 0.000000e+00 : f32
    %38 = vector.broadcast %cst_14 : f32 to vector<4x16x1xf32>
    %39 = arith.subf %38, %37 : vector<4x16x1xf32>
    %cst_15 = arith.constant 0.000000e+00 : f32
    %40 = vector.broadcast %cst_15 : f32 to vector<4x16x1xf32>
    %41 = arith.select %20, %39, %40 : vector<4x16x1xi1>, vector<4x16x1xf32>
    %c0_16 = arith.constant 0 : index
    %c0_17 = arith.constant 0 : index
    %42 = vector.load %arg10[%c0_16, %c0_17] : memref<4x1xf32, #tpu.memory_space<vmem>>, vector<4x1xf32>
    %cst_18 = arith.constant dense<0.000000e+00> : vector<4x1xf32>
    %43 = vector.multi_reduction <add>, %41, %cst_18 [1] : vector<4x16x1xf32> to vector<4x1xf32>
    %44 = arith.addf %42, %43 : vector<4x1xf32>
    %c0_19 = arith.constant 0 : index
    %c0_20 = arith.constant 0 : index
    %45 = vector.load %arg10[%c0_19, %c0_20] : memref<4x1xf32, #tpu.memory_space<vmem>>, vector<4x1xf32>
    tpu.vector_store %arg10[%c0_19, %c0_20], %44 {strides = array<i32>} : memref<4x1xf32, #tpu.memory_space<vmem>>, vector<4x1xf32>,
    %46 = tpu.reciprocal %27 : vector<4x16x1xf32> -> vector<4x16x1xf32>
    %47 = vector.broadcast %46 : vector<4x16x1xf32> to vector<4x16x128xf32>
    %48 = arith.mulf %25, %47 : vector<4x16x128xf32>
    %cst_21 = arith.constant 1.000000e+00 : f32
    %49 = vector.broadcast %cst_21 : f32 to vector<4x16x128xf32>
    %50 = arith.subf %48, %49 : vector<4x16x128xf32>
    %51 = arith.select %30, %50, %48 : vector<4x16x128xi1>, vector<4x16x128xf32>
    %cst_22 = arith.constant 0.000000e+00 : f32
    %52 = vector.shape_cast %20 : vector<4x16x1xi1> to vector<4x16x1xi1>
    %53 = vector.broadcast %52 : vector<4x16x1xi1> to vector<4x16x128xi1>
    %54 = vector.broadcast %cst_22 : f32 to vector<4x16x128xf32>
    %55 = arith.select %53, %51, %54 : vector<4x16x128xi1>, vector<4x16x128xf32>
    %c0_23 = arith.constant 0 : index
    %c0_24 = arith.constant 0 : index
    %c0_25 = arith.constant 0 : index
    %56 = vector.load %arg9[%c0_23, %c0_24, %c0_25] : memref<4x16x128xf32, #tpu.memory_space<vmem>>, vector<4x16x128xf32>
    tpu.vector_store %arg9[%c0_23, %c0_24, %c0_25], %55 {strides = array<i32>} : memref<4x16x128xf32, #tpu.memory_space<vmem>>, vector<4x16x128xf32>,
    %c0_i32_26 = arith.constant 0 : i32
    %57 = arith.cmpi eq, %arg2, %c0_i32_26 : i32
    %58 = arith.extui %57 : i1 to i32
    %c0_i32_27 = arith.constant 0 : i32
    %59 = arith.cmpi ne, %58, %c0_i32_27 : i32
    scf.if %59 {
      %c0_28 = arith.constant 0 : index
      %c0_29 = arith.constant 0 : index
      %60 = vector.load %arg10[%c0_28, %c0_29] : memref<4x1xf32, #tpu.memory_space<vmem>>, vector<4x1xf32>
      %c0_30 = arith.constant 0 : index
      %c0_31 = arith.constant 0 : index
      %c0_32 = arith.constant 0 : index
      %61 = vector.load %arg7[%c0_30, %c0_31, %c0_32] : memref<1x4x1xf32, #tpu.memory_space<vmem>>, vector<1x4x1xf32>
      %62 = vector.shape_cast %61 : vector<1x4x1xf32> to vector<4x1xf32>
      %63 = vector.shape_cast %60 : vector<4x1xf32> to vector<1x4x1xf32>
      tpu.vector_store %arg7[%c0_30, %c0_31, %c0_32], %63 {strides = array<i32>} : memref<1x4x1xf32, #tpu.memory_space<vmem>>, vector<1x4x1xf32>,
      %64 = arith.extui %17 : vector<4x1xi1> to vector<4x1xi32>
      %c0_33 = arith.constant 0 : index
      %c0_34 = arith.constant 0 : index
      %c0_35 = arith.constant 0 : index
      %65 = vector.load %arg8[%c0_33, %c0_34, %c0_35] : memref<1x4x1xi32, #tpu.memory_space<vmem>>, vector<1x4x1xi32>
      %66 = vector.shape_cast %65 : vector<1x4x1xi32> to vector<4x1xi32>
      %67 = vector.shape_cast %64 : vector<4x1xi32> to vector<1x4x1xi32>
      tpu.vector_store %arg8[%c0_33, %c0_34, %c0_35], %67 {strides = array<i32>} : memref<1x4x1xi32, #tpu.memory_space<vmem>>, vector<1x4x1xi32>,
    } else {
    }
    return
  }
  func.func @transform_0(%arg0: i32, %arg1: i32, %arg2: i32) -> (i32, i32, i32) {
    %c1_i32 = arith.constant 1 : i32
    %0 = arith.muli %arg1, %c1_i32 : i32
    %1 = arith.addi %0, %arg2 : i32
    %c0_i32 = arith.constant 0 : i32
    %c0_i32_0 = arith.constant 0 : i32
    return %arg0, %1, %c0_i32 : i32, i32, i32
  }
  func.func @transform_1(%arg0: i32, %arg1: i32, %arg2: i32) -> (i32, i32, i32) {
    %c1_i32 = arith.constant 1 : i32
    %0 = arith.muli %arg1, %c1_i32 : i32
    %1 = arith.addi %0, %arg2 : i32
    %c0_i32 = arith.constant 0 : i32
    %c0_i32_0 = arith.constant 0 : i32
    return %arg0, %1, %c0_i32 : i32, i32, i32
  }
  func.func @transform_2(%arg0: i32, %arg1: i32, %arg2: i32) -> (i32, i32) {
    %c0_i32 = arith.constant 0 : i32
    %c0_i32_0 = arith.constant 0 : i32
    return %arg0, %c0_i32 : i32, i32
  }
  func.func @transform_3(%arg0: i32, %arg1: i32, %arg2: i32) -> (i32, i32) {
    %c0_i32 = arith.constant 0 : i32
    %c0_i32_0 = arith.constant 0 : i32
    return %arg0, %c0_i32 : i32, i32
  }
  func.func @transform_4(%arg0: i32, %arg1: i32, %arg2: i32) -> (i32, i32, i32) {
    %c0_i32 = arith.constant 0 : i32
    %c0_i32_0 = arith.constant 0 : i32
    return %arg1, %arg0, %c0_i32 : i32, i32, i32
  }
  func.func @transform_5(%arg0: i32, %arg1: i32, %arg2: i32) -> (i32, i32, i32) {
    %c0_i32 = arith.constant 0 : i32
    %c0_i32_0 = arith.constant 0 : i32
    return %arg1, %arg0, %c0_i32 : i32, i32, i32
  }
  func.func @transform_6(%arg0: i32, %arg1: i32, %arg2: i32) -> (i32, i32, i32) {
    %c1_i32 = arith.constant 1 : i32
    %0 = arith.muli %arg1, %c1_i32 : i32
    %1 = arith.addi %0, %arg2 : i32
    %c0_i32 = arith.constant 0 : i32
    %c0_i32_0 = arith.constant 0 : i32
    return %arg0, %1, %c0_i32 : i32, i32, i32
  }
}

</mosaic_0001>

<llo_original>
// kernel: partial_grad_forward.1
$region0: #{partial_grad_forward.1}
  #allocation0 [shape = 'u32[]', space=smem, size = 0x4, offset = 0x4, fixed_abs, tag = 'smem constant byte address 0x4 - core index']
  #allocation1 [shape = 'u32[72,128]{1,0:T(1,128)}', space=vmem, size = 0x9000, scoped, tag = 'internal scratch']
  #allocation2 [shape = 'f32[4,1]{1,0:T(4,128)}', space=vmem, size = 0x800, scoped, tag = 'scratch operand']
  %s0 = inlined_call_operand.vmem [shape: f32[4,16,128], index: 0, kind: input, shape index: {}]
  %s1 = inlined_call_operand.vmem [shape: s32[4,16,1], index: 1, kind: input, shape index: {}]
  %s2 = inlined_call_operand.vmem [shape: s32[4,1], index: 2, kind: input, shape index: {}]
  %s3 = inlined_call_operand.vmem [shape: s32[4,1], index: 3, kind: input, shape index: {}]
  %s4 = inlined_call_operand.vmem [shape: f32[1,4,1], index: 4, kind: output, shape index: {0}]
  %s5 = inlined_call_operand.vmem [shape: s32[1,4,1], index: 5, kind: output, shape index: {1}]
  %s6 = inlined_call_operand.hbm [shape: f32[4,16,128], index: 6, kind: output, shape index: {2}]
  %7 = xla_tuple %s4, %s5, %s6
  %s8 = sld [smem:[#allocation0]]
  $region50: #{partial_grad_forward.1} parent=0
    _
  %s10 = ssub.s32 1, %s8
  %s11 = scalar_select 0, %s10, %s8
  $region1: #{partial_grad_forward.1} parent=0
    #allocation3 [shape = 'u8[32768]{0}', space=vmem, size = 0x8000, scoped, tag = 'output window, operand 2, single buffered']
    #allocation4 [shape = 's32[1]{0}', space=sflag, size = 0x4, scoped, tag = 'scoped memory for partial_grad_forward.1']
    %12 = vsyncpa [#allocation4], 0
    // Predicated region
    $region2: #{partial_grad_forward.1} parent=1 // pred_check
      _
    $region3: #{partial_grad_forward.1} parent=1 // pred_check_branch
      %14 = sbr.rel (0) target = $region5
    $region4: #{partial_grad_forward.1} parent=1 // pred_region
      %s15 = sadd.s32 0, 0
      %s16 = smul.u32 2, %s15
      %p17 = scmp.lt.s32.totalorder %s16, 1
      %s18 = scalar_select %p17, %s16, 1
      %s19 = smul.addr %s18, 8
      %s20 = scalar_lea.vmem %s0, %s19
      %s21 = sadd.s32 0, 0
      %s22 = smul.u32 2, %s21
    $region5: #{partial_grad_forward.1} parent=1 // pred_fallthru
      _
    // Predicated region
    $region6: #{partial_grad_forward.1} parent=1 // pred_check
      _
    $region7: #{partial_grad_forward.1} parent=1 // pred_check_branch
      %24 = sbr.rel (0) target = $region9
    $region8: #{partial_grad_forward.1} parent=1 // pred_region
      %s25 = sadd.s32 0, 0
      %s26 = smul.u32 2, %s25
      %p27 = scmp.lt.s32.totalorder %s26, 1
      %s28 = scalar_select %p27, %s26, 1
      %s29 = smul.addr %s28, 8
      %s30 = scalar_lea.vmem %s1, %s29
      %s31 = sadd.s32 0, 0
      %s32 = smul.u32 2, %s31
    $region9: #{partial_grad_forward.1} parent=1 // pred_fallthru
      _
    // Predicated region
    $region10: #{partial_grad_forward.1} parent=1 // pred_check
      _
    $region11: #{partial_grad_forward.1} parent=1 // pred_check_branch
      %34 = sbr.rel (0) target = $region13
    $region12: #{partial_grad_forward.1} parent=1 // pred_region
      _
    $region13: #{partial_grad_forward.1} parent=1 // pred_fallthru
      _
    // Predicated region
    $region14: #{partial_grad_forward.1} parent=1 // pred_check
      _
    $region15: #{partial_grad_forward.1} parent=1 // pred_check_branch
      %36 = sbr.rel (0) target = $region17
    $region16: #{partial_grad_forward.1} parent=1 // pred_region
      _
    $region17: #{partial_grad_forward.1} parent=1 // pred_fallthru
      _
    %s37 = sadd.s32 0, 0
    %s38 = smul.u32 2, %s37
    %p39 = scmp.lt.s32.totalorder %s38, 1
    %s40 = scalar_select %p39, %s38, 1
    %s41 = smul.addr %s40, 8
    %s42 = scalar_lea.vmem %s0, %s41
    %s43 = sadd.s32 0, 0
    %s44 = smul.u32 2, %s43
    %p45 = scmp.lt.s32.totalorder %s44, 1
    %s46 = scalar_select %p45, %s44, 1
    %s47 = smul.addr %s46, 8
    %s48 = scalar_lea.vmem %s1, %s47
    %s49 = sadd.s32 0, 0
    %s50 = smul.u32 2, %s49
    %p51 = scmp.lt.s32.totalorder %s50, 1
    %s52 = scalar_select %p51, %s50, 1
    %s53 = smul.addr %s52, 8
    %s54 = scalar_lea.vmem %s0, %s53
    %s55 = sadd.s32 0, 0
    %s56 = smul.u32 2, %s55
    %s57 = sadd.s32 0, 0
    %s58 = smul.u32 2, %s57
    %p59 = scmp.lt.s32.totalorder %s58, 1
    %s60 = scalar_select %p59, %s58, 1
    %s61 = smul.addr %s60, 8
    %s62 = scalar_lea.vmem %s1, %s61
    %s63 = sadd.s32 0, 0
    %s64 = smul.u32 2, %s63
    %s65 = sadd.s32 0, 0
    %s66 = smul.u32 2, %s65
    %p67 = scmp.eq.s32.totalorder 0, 0
    // Predicated region
    $region18: #{partial_grad_forward.1} parent=1 // pred_check
      %p68 = pneg %p67
    $region19: #{partial_grad_forward.1} parent=1 // pred_check_branch
      %70 = sbr.rel (%p68) target = $region21
    $region20: #{partial_grad_forward.1} parent=1 // pred_region
      %vm71 = vcmask 3072
      %72 = vst.msk [vmem:[#allocation2] sm:$0xf] %vm71, 0.0
    $region21: #{partial_grad_forward.1} parent=1 // pred_fallthru
      _
    %v73 = vld [vmem:[%s54] sm:$0xff]
    %v74 = vld [vmem:[%s54 + $0x8] sm:$0xff]
    %v75 = vld [vmem:[%s54 + $0x10] sm:$0xff]
    %v76 = vld [vmem:[%s54 + $0x18] sm:$0xff]
    %v77 = vld [vmem:[%s54 + $0x20] sm:$0xff]
    %v78 = vld [vmem:[%s54 + $0x28] sm:$0xff]
    %v79 = vld [vmem:[%s54 + $0x30] sm:$0xff]
    %v80 = vld [vmem:[%s54 + $0x38] sm:$0xff]
    %v81 = vld [vmem:[%s62] sm:$0xff]
    %v82 = vld [vmem:[%s62 + $0x8] sm:$0xff]
    %v83 = vld [vmem:[%s62 + $0x10] sm:$0xff]
    %v84 = vld [vmem:[%s62 + $0x18] sm:$0xff]
    %v85 = vld [vmem:[%s62 + $0x20] sm:$0xff]
    %v86 = vld [vmem:[%s62 + $0x28] sm:$0xff]
    %v87 = vld [vmem:[%s62 + $0x30] sm:$0xff]
    %v88 = vld [vmem:[%s62 + $0x38] sm:$0xff]
    %v89 = vld [vmem:[%s2] sm:$0xf]
    %v90 = vld [vmem:[%s3] sm:$0xf]
    %s91 = sadd.s32 0, 0
    %s92 = smul.u32 %s91, 16
    %v93 = vlaneseq
    %v94 = vshrl.u32 %v93, 7
    %v95 = vadd.s32 %v94, 8
    %v96 = vstv %s92
    %v97 = vadd.s32 %v96, %v94
    %v98 = vadd.s32 %v96, %v95
    %v99 = vrot.slane %v89, 1
    %v100 = vrot.slane %v89, 2
    %v101 = vrot.slane %v89, 3
    %v102 = vperm.slane %v89, 0
    %v103 = vperm.slane %v99, 0
    %v104 = vperm.slane %v100, 0
    %v105 = vperm.slane %v101, 0
    %vm106 = vcmp.lt.s32.totalorder %v97, %v102
    %vm107 = vcmp.lt.s32.totalorder %v98, %v102
    %vm108 = vcmp.lt.s32.totalorder %v97, %v103
    %vm109 = vcmp.lt.s32.totalorder %v98, %v103
    %vm110 = vcmp.lt.s32.totalorder %v97, %v104
    %vm111 = vcmp.lt.s32.totalorder %v98, %v104
    %vm112 = vcmp.lt.s32.totalorder %v97, %v105
    %vm113 = vcmp.lt.s32.totalorder %v98, %v105
    %vm114 = vcmp.gt.s32.totalorder %v90, 0
    %v115 = vsel %vm114, 1, 0
    %v116 = vrot.slane %v115, 1
    %v117 = vrot.slane %v115, 2
    %v118 = vrot.slane %v115, 3
    %vm119 = vcmp.ne.s32.totalorder %v116, 0
    %vm120 = vcmp.ne.s32.totalorder %v117, 0
    %vm121 = vcmp.ne.s32.totalorder %v118, 0
    %v122 = vsel %vm119, 1, 0
    %v123 = vsel %vm120, 1, 0
    %v124 = vsel %vm121, 1, 0
    %v125 = vperm.slane %v115, 0
    %v126 = vperm.slane %v122, 0
    %v127 = vperm.slane %v123, 0
    %v128 = vperm.slane %v124, 0
    %vm129 = vcmp.eq.s32.totalorder %v125, 1
    %vm130 = vcmp.eq.s32.totalorder %v126, 1
    %vm131 = vcmp.eq.s32.totalorder %v127, 1
    %vm132 = vcmp.eq.s32.totalorder %v128, 1
    %vm133 = vmand %vm106, %vm129
    %vm134 = vmand %vm107, %vm129
    %vm135 = vmand %vm108, %vm130
    %vm136 = vmand %vm109, %vm130
    %vm137 = vmand %vm110, %vm131
    %vm138 = vmand %vm111, %vm131
    %vm139 = vmand %vm112, %vm132
    %vm140 = vmand %vm113, %vm132
    %141 = vmax.xlane.f32.xlu0 %v73
    %v142 = vpop.xlane.xlu0 %141
    %143 = vmax.xlane.f32.xlu0 %v74
    %v144 = vpop.xlane.xlu0 %143
    %145 = vmax.xlane.f32.xlu0 %v75
    %v146 = vpop.xlane.xlu0 %145
    %147 = vmax.xlane.f32.xlu0 %v76
    %v148 = vpop.xlane.xlu0 %147
    %149 = vmax.xlane.f32.xlu0 %v77
    %v150 = vpop.xlane.xlu0 %149
    %151 = vmax.xlane.f32.xlu0 %v78
    %v152 = vpop.xlane.xlu0 %151
    %153 = vmax.xlane.f32.xlu0 %v79
    %v154 = vpop.xlane.xlu0 %153
    %155 = vmax.xlane.f32.xlu0 %v80
    %v156 = vpop.xlane.xlu0 %155
    %v157 = vsub.f32 %v73, %v142
    %v158 = vsub.f32 %v74, %v144
    %v159 = vsub.f32 %v75, %v146
    %v160 = vsub.f32 %v76, %v148
    %v161 = vsub.f32 %v77, %v150
    %v162 = vsub.f32 %v78, %v152
    %v163 = vsub.f32 %v79, %v154
    %v164 = vsub.f32 %v80, %v156
    %v165 = vmul.f32 %v157, 1.442695
    %v166 = vpow.pop %v165
    %v167 = vmul.f32 %v158, 1.442695
    %v168 = vpow.pop %v167
    %v169 = vmul.f32 %v159, 1.442695
    %v170 = vpow.pop %v169
    %v171 = vmul.f32 %v160, 1.442695
    %v172 = vpow.pop %v171
    %v173 = vmul.f32 %v161, 1.442695
    %v174 = vpow.pop %v173
    %v175 = vmul.f32 %v162, 1.442695
    %v176 = vpow.pop %v175
    %v177 = vmul.f32 %v163, 1.442695
    %v178 = vpow.pop %v177
    %v179 = vmul.f32 %v164, 1.442695
    %v180 = vpow.pop %v179
    %181 = vadd.xlane.f32.xlu0 %v166
    %v182 = vpop.xlane.xlu0 %181
    %183 = vadd.xlane.f32.xlu0 %v168
    %v184 = vpop.xlane.xlu0 %183
    %185 = vadd.xlane.f32.xlu0 %v170
    %v186 = vpop.xlane.xlu0 %185
    %187 = vadd.xlane.f32.xlu0 %v172
    %v188 = vpop.xlane.xlu0 %187
    %189 = vadd.xlane.f32.xlu0 %v174
    %v190 = vpop.xlane.xlu0 %189
    %191 = vadd.xlane.f32.xlu0 %v176
    %v192 = vpop.xlane.xlu0 %191
    %193 = vadd.xlane.f32.xlu0 %v178
    %v194 = vpop.xlane.xlu0 %193
    %195 = vadd.xlane.f32.xlu0 %v180
    %v196 = vpop.xlane.xlu0 %195
    %v197 = vlaneseq
    %v198 = vand.u32 %v197, 127
    %199 = vset.pattern.permute.xlu0 0
    %200 = vperm.xlu0 %199, %v81
    %v201 = vpop.permute.xlu0 %200
    %202 = vset.pattern.permute.xlu0 0
    %203 = vperm.xlu0 %202, %v82
    %v204 = vpop.permute.xlu0 %203
    %205 = vset.pattern.permute.xlu0 0
    %206 = vperm.xlu0 %205, %v83
    %v207 = vpop.permute.xlu0 %206
    %208 = vset.pattern.permute.xlu0 0
    %209 = vperm.xlu0 %208, %v84
    %v210 = vpop.permute.xlu0 %209
    %211 = vset.pattern.permute.xlu0 0
    %212 = vperm.xlu0 %211, %v85
    %v213 = vpop.permute.xlu0 %212
    %214 = vset.pattern.permute.xlu0 0
    %215 = vperm.xlu0 %214, %v86
    %v216 = vpop.permute.xlu0 %215
    %217 = vset.pattern.permute.xlu0 0
    %218 = vperm.xlu0 %217, %v87
    %v219 = vpop.permute.xlu0 %218
    %220 = vset.pattern.permute.xlu0 0
    %221 = vperm.xlu0 %220, %v88
    %v222 = vpop.permute.xlu0 %221
    %vm223 = vcmp.eq.s32.totalorder %v198, %v201
    %vm224 = vcmp.eq.s32.totalorder %v198, %v204
    %vm225 = vcmp.eq.s32.totalorder %v198, %v207
    %vm226 = vcmp.eq.s32.totalorder %v198, %v210
    %vm227 = vcmp.eq.s32.totalorder %v198, %v213
    %vm228 = vcmp.eq.s32.totalorder %v198, %v216
    %vm229 = vcmp.eq.s32.totalorder %v198, %v219
    %vm230 = vcmp.eq.s32.totalorder %v198, %v222
    %v231 = vsel %vm223, %v73, 0.0
    %v232 = vsel %vm224, %v74, 0.0
    %v233 = vsel %vm225, %v75, 0.0
    %v234 = vsel %vm226, %v76, 0.0
    %v235 = vsel %vm227, %v77, 0.0
    %v236 = vsel %vm228, %v78, 0.0
    %v237 = vsel %vm229, %v79, 0.0
    %v238 = vsel %vm230, %v80, 0.0
    %239 = vadd.xlane.f32.xlu0 %v231
    %v240 = vpop.xlane.xlu0 %239
    %241 = vadd.xlane.f32.xlu0 %v232
    %v242 = vpop.xlane.xlu0 %241
    %243 = vadd.xlane.f32.xlu0 %v233
    %v244 = vpop.xlane.xlu0 %243
    %245 = vadd.xlane.f32.xlu0 %v234
    %v246 = vpop.xlane.xlu0 %245
    %247 = vadd.xlane.f32.xlu0 %v235
    %v248 = vpop.xlane.xlu0 %247
    %249 = vadd.xlane.f32.xlu0 %v236
    %v250 = vpop.xlane.xlu0 %249
    %251 = vadd.xlane.f32.xlu0 %v237
    %v252 = vpop.xlane.xlu0 %251
    %253 = vadd.xlane.f32.xlu0 %v238
    %v254 = vpop.xlane.xlu0 %253
    %v255 = vlog2.pop %v182
    %v256 = vmul.f32 %v255, 0.6931472
    %v257 = vlog2.pop %v184
    %v258 = vmul.f32 %v257, 0.6931472
    %v259 = vlog2.pop %v186
    %v260 = vmul.f32 %v259, 0.6931472
    %v261 = vlog2.pop %v188
    %v262 = vmul.f32 %v261, 0.6931472
    %v263 = vlog2.pop %v190
    %v264 = vmul.f32 %v263, 0.6931472
    %v265 = vlog2.pop %v192
    %v266 = vmul.f32 %v265, 0.6931472
    %v267 = vlog2.pop %v194
    %v268 = vmul.f32 %v267, 0.6931472
    %v269 = vlog2.pop %v196
    %v270 = vmul.f32 %v269, 0.6931472
    %v271 = vadd.f32 %v142, %v256
    %v272 = vadd.f32 %v144, %v258
    %v273 = vadd.f32 %v146, %v260
    %v274 = vadd.f32 %v148, %v262
    %v275 = vadd.f32 %v150, %v264
    %v276 = vadd.f32 %v152, %v266
    %v277 = vadd.f32 %v154, %v268
    %v278 = vadd.f32 %v156, %v270
    %v279 = vsub.f32 %v240, %v271
    %v280 = vsub.f32 %v242, %v272
    %v281 = vsub.f32 %v244, %v273
    %v282 = vsub.f32 %v246, %v274
    %v283 = vsub.f32 %v248, %v275
    %v284 = vsub.f32 %v250, %v276
    %v285 = vsub.f32 %v252, %v277
    %v286 = vsub.f32 %v254, %v278
    %v287 = vsub.f32 0.0, %v279
    %v288 = vsub.f32 0.0, %v280
    %v289 = vsub.f32 0.0, %v281
    %v290 = vsub.f32 0.0, %v282
    %v291 = vsub.f32 0.0, %v283
    %v292 = vsub.f32 0.0, %v284
    %v293 = vsub.f32 0.0, %v285
    %v294 = vsub.f32 0.0, %v286
    %v295 = vsel %vm133, %v287, 0.0
    %v296 = vsel %vm134, %v288, 0.0
    %v297 = vsel %vm135, %v289, 0.0
    %v298 = vsel %vm136, %v290, 0.0
    %v299 = vsel %vm137, %v291, 0.0
    %v300 = vsel %vm138, %v292, 0.0
    %v301 = vsel %vm139, %v293, 0.0
    %v302 = vsel %vm140, %v294, 0.0
    %v303 = vld [vmem:[#allocation2] sm:$0xf]
    %vm304 = vcmask 7168
    %v305 = vsel %vm304, %v295, 0.0
    %v306 = vsel %vm304, %v296, 0.0
    %v307 = vadd.f32 %v305, %v306
    %v308 = vrot.slane %v307, 4
    %v309 = vadd.f32 %v307, %v308
    %v310 = vrot.slane %v309, 2
    %v311 = vadd.f32 %v309, %v310
    %v312 = vrot.slane %v311, 1
    %v313 = vadd.f32 %v311, %v312
    %v314 = vsel %vm304, %v297, 0.0
    %v315 = vsel %vm304, %v298, 0.0
    %v316 = vadd.f32 %v314, %v315
    %v317 = vrot.slane %v316, 4
    %v318 = vadd.f32 %v316, %v317
    %v319 = vrot.slane %v318, 2
    %v320 = vadd.f32 %v318, %v319
    %v321 = vrot.slane %v320, 1
    %v322 = vadd.f32 %v320, %v321
    %v323 = vsel %vm304, %v299, 0.0
    %v324 = vsel %vm304, %v300, 0.0
    %v325 = vadd.f32 %v323, %v324
    %v326 = vrot.slane %v325, 4
    %v327 = vadd.f32 %v325, %v326
    %v328 = vrot.slane %v327, 2
    %v329 = vadd.f32 %v327, %v328
    %v330 = vrot.slane %v329, 1
    %v331 = vadd.f32 %v329, %v330
    %v332 = vsel %vm304, %v301, 0.0
    %v333 = vsel %vm304, %v302, 0.0
    %v334 = vadd.f32 %v332, %v333
    %v335 = vrot.slane %v334, 4
    %v336 = vadd.f32 %v334, %v335
    %v337 = vrot.slane %v336, 2
    %v338 = vadd.f32 %v336, %v337
    %v339 = vrot.slane %v338, 1
    %v340 = vadd.f32 %v338, %v339
    %vm345 = vcmask 1041409
    %v346 = vsel %vm345, %v322, %v313
    %vm347 = vcmask 1042434
    %v348 = vsel %vm347, %v331, %v346
    %vm349 = vcmask 1043459
    %v350 = vsel %vm349, %v340, %v348
    %v352 = vadd.f32 %v303, %v350
    %vm353 = vcmask 3072
    %354 = vst.msk [vmem:[#allocation2] sm:$0xf] %vm353, %v352
    %v355 = vrcp.pop %v182
    %v356 = vmul.f32 %v182, %v355
    %v357 = vsub.f32 1.0, %v356
    %v358 = vmul.f32 %v355, %v357
    %v359 = vadd.f32 %v355, %v358
    %vm360 = vweird.f32 %v182
    %vm361 = vweird.f32 %v355
    %vm362 = vmor %vm360, %vm361
    %v363 = vsel %vm362, %v355, %v359
    %v364 = vand.u32 2147483647, %v182
    %vm365 = vcmp.eq.f32.partialorder %v364, 8.507059e+37
    %v366 = vand.u32 %v182, 2147483648
    %v367 = vor.u32 1.1754944e-38, %v366
    %v368 = vsel %vm365, %v367, %v363
    %v369 = vrcp.pop %v184
    %v370 = vmul.f32 %v184, %v369
    %v371 = vsub.f32 1.0, %v370
    %v372 = vmul.f32 %v369, %v371
    %v373 = vadd.f32 %v369, %v372
    %vm374 = vweird.f32 %v184
    %vm375 = vweird.f32 %v369
    %vm376 = vmor %vm374, %vm375
    %v377 = vsel %vm376, %v369, %v373
    %v378 = vand.u32 2147483647, %v184
    %vm379 = vcmp.eq.f32.partialorder %v378, 8.507059e+37
    %v380 = vand.u32 %v184, 2147483648
    %v381 = vor.u32 1.1754944e-38, %v380
    %v382 = vsel %vm379, %v381, %v377
    %v383 = vrcp.pop %v186
    %v384 = vmul.f32 %v186, %v383
    %v385 = vsub.f32 1.0, %v384
    %v386 = vmul.f32 %v383, %v385
    %v387 = vadd.f32 %v383, %v386
    %vm388 = vweird.f32 %v186
    %vm389 = vweird.f32 %v383
    %vm390 = vmor %vm388, %vm389
    %v391 = vsel %vm390, %v383, %v387
    %v392 = vand.u32 2147483647, %v186
    %vm393 = vcmp.eq.f32.partialorder %v392, 8.507059e+37
    %v394 = vand.u32 %v186, 2147483648
    %v395 = vor.u32 1.1754944e-38, %v394
    %v396 = vsel %vm393, %v395, %v391
    %v397 = vrcp.pop %v188
    %v398 = vmul.f32 %v188, %v397
    %v399 = vsub.f32 1.0, %v398
    %v400 = vmul.f32 %v397, %v399
    %v401 = vadd.f32 %v397, %v400
    %vm402 = vweird.f32 %v188
    %vm403 = vweird.f32 %v397
    %vm404 = vmor %vm402, %vm403
    %v405 = vsel %vm404, %v397, %v401
    %v406 = vand.u32 2147483647, %v188
    %vm407 = vcmp.eq.f32.partialorder %v406, 8.507059e+37
    %v408 = vand.u32 %v188, 2147483648
    %v409 = vor.u32 1.1754944e-38, %v408
    %v410 = vsel %vm407, %v409, %v405
    %v411 = vrcp.pop %v190
    %v412 = vmul.f32 %v190, %v411
    %v413 = vsub.f32 1.0, %v412
    %v414 = vmul.f32 %v411, %v413
    %v415 = vadd.f32 %v411, %v414
    %vm416 = vweird.f32 %v190
    %vm417 = vweird.f32 %v411
    %vm418 = vmor %vm416, %vm417
    %v419 = vsel %vm418, %v411, %v415
    %v420 = vand.u32 2147483647, %v190
    %vm421 = vcmp.eq.f32.partialorder %v420, 8.507059e+37
    %v422 = vand.u32 %v190, 2147483648
    %v423 = vor.u32 1.1754944e-38, %v422
    %v424 = vsel %vm421, %v423, %v419
    %v425 = vrcp.pop %v192
    %v426 = vmul.f32 %v192, %v425
    %v427 = vsub.f32 1.0, %v426
    %v428 = vmul.f32 %v425, %v427
    %v429 = vadd.f32 %v425, %v428
    %vm430 = vweird.f32 %v192
    %vm431 = vweird.f32 %v425
    %vm432 = vmor %vm430, %vm431
    %v433 = vsel %vm432, %v425, %v429
    %v434 = vand.u32 2147483647, %v192
    %vm435 = vcmp.eq.f32.partialorder %v434, 8.507059e+37
    %v436 = vand.u32 %v192, 2147483648
    %v437 = vor.u32 1.1754944e-38, %v436
    %v438 = vsel %vm435, %v437, %v433
    %v439 = vrcp.pop %v194
    %v440 = vmul.f32 %v194, %v439
    %v441 = vsub.f32 1.0, %v440
    %v442 = vmul.f32 %v439, %v441
    %v443 = vadd.f32 %v439, %v442
    %vm444 = vweird.f32 %v194
    %vm445 = vweird.f32 %v439
    %vm446 = vmor %vm444, %vm445
    %v447 = vsel %vm446, %v439, %v443
    %v448 = vand.u32 2147483647, %v194
    %vm449 = vcmp.eq.f32.partialorder %v448, 8.507059e+37
    %v450 = vand.u32 %v194, 2147483648
    %v451 = vor.u32 1.1754944e-38, %v450
    %v452 = vsel %vm449, %v451, %v447
    %v453 = vrcp.pop %v196
    %v454 = vmul.f32 %v196, %v453
    %v455 = vsub.f32 1.0, %v454
    %v456 = vmul.f32 %v453, %v455
    %v457 = vadd.f32 %v453, %v456
    %vm458 = vweird.f32 %v196
    %vm459 = vweird.f32 %v453
    %vm460 = vmor %vm458, %vm459
    %v461 = vsel %vm460, %v453, %v457
    %v462 = vand.u32 2147483647, %v196
    %vm463 = vcmp.eq.f32.partialorder %v462, 8.507059e+37
    %v464 = vand.u32 %v196, 2147483648
    %v465 = vor.u32 1.1754944e-38, %v464
    %v466 = vsel %vm463, %v465, %v461
    %v467 = vmul.f32 %v166, %v368
    %v468 = vmul.f32 %v168, %v382
    %v469 = vmul.f32 %v170, %v396
    %v470 = vmul.f32 %v172, %v410
    %v471 = vmul.f32 %v174, %v424
    %v472 = vmul.f32 %v176, %v438
    %v473 = vmul.f32 %v178, %v452
    %v474 = vmul.f32 %v180, %v466
    %v475 = vsub.f32 %v467, 1.0
    %v476 = vsub.f32 %v468, 1.0
    %v477 = vsub.f32 %v469, 1.0
    %v478 = vsub.f32 %v470, 1.0
    %v479 = vsub.f32 %v471, 1.0
    %v480 = vsub.f32 %v472, 1.0
    %v481 = vsub.f32 %v473, 1.0
    %v482 = vsub.f32 %v474, 1.0
    %v483 = vsel %vm223, %v475, %v467
    %v484 = vsel %vm224, %v476, %v468
    %v485 = vsel %vm225, %v477, %v469
    %v486 = vsel %vm226, %v478, %v470
    %v487 = vsel %vm227, %v479, %v471
    %v488 = vsel %vm228, %v480, %v472
    %v489 = vsel %vm229, %v481, %v473
    %v490 = vsel %vm230, %v482, %v474
    %v491 = vsel %vm133, 1, 0
    %v492 = vsel %vm134, 1, 0
    %v493 = vsel %vm135, 1, 0
    %v494 = vsel %vm136, 1, 0
    %v495 = vsel %vm137, 1, 0
    %v496 = vsel %vm138, 1, 0
    %v497 = vsel %vm139, 1, 0
    %v498 = vsel %vm140, 1, 0
    %499 = vset.pattern.permute.xlu0 0
    %500 = vperm.xlu0 %499, %v491
    %v501 = vpop.permute.xlu0 %500
    %502 = vset.pattern.permute.xlu0 0
    %503 = vperm.xlu0 %502, %v492
    %v504 = vpop.permute.xlu0 %503
    %505 = vset.pattern.permute.xlu0 0
    %506 = vperm.xlu0 %505, %v493
    %v507 = vpop.permute.xlu0 %506
    %508 = vset.pattern.permute.xlu0 0
    %509 = vperm.xlu0 %508, %v494
    %v510 = vpop.permute.xlu0 %509
    %511 = vset.pattern.permute.xlu0 0
    %512 = vperm.xlu0 %511, %v495
    %v513 = vpop.permute.xlu0 %512
    %514 = vset.pattern.permute.xlu0 0
    %515 = vperm.xlu0 %514, %v496
    %v516 = vpop.permute.xlu0 %515
    %517 = vset.pattern.permute.xlu0 0
    %518 = vperm.xlu0 %517, %v497
    %v519 = vpop.permute.xlu0 %518
    %520 = vset.pattern.permute.xlu0 0
    %521 = vperm.xlu0 %520, %v498
    %v522 = vpop.permute.xlu0 %521
    %vm523 = vcmp.eq.s32.totalorder %v501, 1
    %vm524 = vcmp.eq.s32.totalorder %v504, 1
    %vm525 = vcmp.eq.s32.totalorder %v507, 1
    %vm526 = vcmp.eq.s32.totalorder %v510, 1
    %vm527 = vcmp.eq.s32.totalorder %v513, 1
    %vm528 = vcmp.eq.s32.totalorder %v516, 1
    %vm529 = vcmp.eq.s32.totalorder %v519, 1
    %vm530 = vcmp.eq.s32.totalorder %v522, 1
    %v531 = vsel %vm523, %v483, 0.0
    %v532 = vsel %vm524, %v484, 0.0
    %v533 = vsel %vm525, %v485, 0.0
    %v534 = vsel %vm526, %v486, 0.0
    %v535 = vsel %vm527, %v487, 0.0
    %v536 = vsel %vm528, %v488, 0.0
    %v537 = vsel %vm529, %v489, 0.0
    %v538 = vsel %vm530, %v490, 0.0
    %539 = vst [vmem:[#allocation3] sm:$0xff] %v531
    %540 = vst [vmem:[#allocation3 + $0x8] sm:$0xff] %v532
    %541 = vst [vmem:[#allocation3 + $0x10] sm:$0xff] %v533
    %542 = vst [vmem:[#allocation3 + $0x18] sm:$0xff] %v534
    %543 = vst [vmem:[#allocation3 + $0x20] sm:$0xff] %v535
    %544 = vst [vmem:[#allocation3 + $0x28] sm:$0xff] %v536
    %545 = vst [vmem:[#allocation3 + $0x30] sm:$0xff] %v537
    %546 = vst [vmem:[#allocation3 + $0x38] sm:$0xff] %v538
    // Predicated region
    $region22: #{partial_grad_forward.1} parent=1 // pred_check
      %p547 = pneg %p67
    $region23: #{partial_grad_forward.1} parent=1 // pred_check_branch
      %549 = sbr.rel (%p547) target = $region25
    $region24: #{partial_grad_forward.1} parent=1 // pred_region
      %v550 = vld [vmem:[#allocation2] sm:$0xf]
      %551 = vst.msk [vmem:[%s4] sm:$0xf] %vm353, %v550
      %552 = vst.msk [vmem:[%s5] sm:$0xf] %vm353, %v115
    $region25: #{partial_grad_forward.1} parent=1 // pred_fallthru
      _
    // Predicated region
    $region26: #{partial_grad_forward.1} parent=1 // pred_check
      _
    $region27: #{partial_grad_forward.1} parent=1 // pred_check_branch
      %554 = sbr.rel (0) target = $region29
    $region28: #{partial_grad_forward.1} parent=1 // pred_region
      _
    $region29: #{partial_grad_forward.1} parent=1 // pred_fallthru
      _
    // Predicated region
    $region30: #{partial_grad_forward.1} parent=1 // pred_check
      _
    $region31: #{partial_grad_forward.1} parent=1 // pred_check_branch
      %556 = sbr.rel (0) target = $region33
    $region32: #{partial_grad_forward.1} parent=1 // pred_region
      _
    $region33: #{partial_grad_forward.1} parent=1 // pred_fallthru
      _
    // Predicated region
    $region34: #{partial_grad_forward.1} parent=1 // pred_check
      _
    $region35: #{partial_grad_forward.1} parent=1 // pred_check_branch
      %558 = sbr.rel (0) target = $region37
    $region36: #{partial_grad_forward.1} parent=1 // pred_region
      %s559 = sadd.s32 0, 0
      %s560 = smul.u32 2, %s559
      %562 = vsyncadd [#allocation4], 0
      %s563 = smul.addr %s560, 8
      %s564 = scalar_lea.hbm %s6, %s563
      %s565 = sshll.u32 [#allocation3], 4
      %s566 = int_to_ptr.vmem [resolvable:$true] %s565
      %s567 = sshll.u32 %s564, 4
      %s568 = int_to_ptr.hbm [resolvable:$true] %s567
      %573 = dma.vmem_to_hbm [thread:$0]  %s566, 1024, %s568, [#allocation4], 128, 128, 8
    $region37: #{partial_grad_forward.1} parent=1 // pred_fallthru
      _
    // Predicated region
    $region38: #{partial_grad_forward.1} parent=1 // pred_check
      _
    $region39: #{partial_grad_forward.1} parent=1 // pred_check_branch
      %575 = sbr.rel (0) target = $region41
    $region40: #{partial_grad_forward.1} parent=1 // pred_region
      _
    $region41: #{partial_grad_forward.1} parent=1 // pred_fallthru
      _
    // Predicated region
    $region42: #{partial_grad_forward.1} parent=1 // pred_check
      _
    $region43: #{partial_grad_forward.1} parent=1 // pred_check_branch
      %577 = sbr.rel (0) target = $region45
    $region44: #{partial_grad_forward.1} parent=1 // pred_region
      _
    $region45: #{partial_grad_forward.1} parent=1 // pred_fallthru
      _
    // Predicated region
    $region46: #{partial_grad_forward.1} parent=1 // pred_check
      _
    $region47: #{partial_grad_forward.1} parent=1 // pred_check_branch
      %579 = sbr.rel (0) target = $region49
    $region48: #{partial_grad_forward.1} parent=1 // pred_region
      %581 = dma.done [#allocation4], 1024
    $region49: #{partial_grad_forward.1} parent=1 // pred_fallthru
      _
    %582 = vsyncpa [#allocation4], 1

</llo_original>
